<compile_context>
chip_gen: v6e
topology: v6e:2x2x1
jax: 0.10.0
libtpu: 0.0.40
codegen_flags: <defaults>
</compile_context>

<pallas_src>
import functools

import jax
import jax.numpy as jnp
from jax.experimental import pallas as pl
from jax.experimental.pallas import tpu as pltpu

C_IN, C_OUT, K, PAD = 4, 6, 3, 1
BN_EPS = 1e-5

# Packed parameter tile: (8, 128) f32, rows = conv output channels (rows
# C_OUT..7 are zero padding and contribute exactly 0 everywhere downstream).
#   cols [k*C_IN, (k+1)*C_IN) : BN-folded conv tap k   (k = 0, 1, 2)
#   col  12                   : BN-folded bias  (beta - mean*scale)
#   col  13                   : fc_mu weight
#   col  14                   : fc_mu bias (row 0)
P_ROWS, P_COLS = 8, 128
_B_COL = 3 * C_IN        # 12
_WFC_COL = 3 * C_IN + 1  # 13
_BFC_COL = 3 * C_IN + 2  # 14


def _forward_kernel(x_ref, p_ref, out_ref):
    # x_ref  : (C_IN, L)   one batch sample (batch dim squeezed by BlockSpec)
    # p_ref  : (8, 128)    packed parameters, resident across the grid
    # out_ref: (1, 1)      mu for this batch sample
    x = x_ref[...]
    p = p_ref[...]
    L = x.shape[1]

    w0 = p[:, 0 * C_IN:1 * C_IN]            # (8, C_IN)  tap k=0  -> x[t-1]
    w1 = p[:, 1 * C_IN:2 * C_IN]            # (8, C_IN)  tap k=1  -> x[t]
    w2 = p[:, 2 * C_IN:3 * C_IN]            # (8, C_IN)  tap k=2  -> x[t+1]
    bias = p[:, _B_COL:_B_COL + 1]          # (8, 1)   BN-folded bias
    w_fc = p[:, _WFC_COL:_WFC_COL + 1]      # (8, 1)
    b_fc = p[0:1, _BFC_COL:_BFC_COL + 1]    # (1, 1)

    # Zero-padded conv halo built along the LANE axis only (no sublane
    # concat, no im2col): two lane-shifted views of x.
    zero_col = jnp.zeros((C_IN, 1), jnp.float32)
    x_m1 = jnp.concatenate([zero_col, x[:, :L - 1]], axis=1)   # x[t-1]
    x_p1 = jnp.concatenate([x[:, 1:], zero_col], axis=1)       # x[t+1]

    # Conv1d + folded BatchNorm as three accumulated (8, C_IN) x (C_IN, L)
    # matmuls -> single lane-dense (8, L) activation tile.
    y = jnp.dot(w1, x, preferred_element_type=jnp.float32)
    y += jnp.dot(w0, x_m1, preferred_element_type=jnp.float32)
    y += jnp.dot(w2, x_p1, preferred_element_type=jnp.float32)

    # Bias + ReLU (zero-padded channel rows stay exactly zero).
    y = jnp.maximum(y + bias, 0.0)

    # Dropout(p=0.5) is identity in eval mode.
    # TODO(synk): MC-dropout sampling needs pltpu.prng_seed +
    # pltpu.stateful_bernoulli and a 1/(1-p) rescale; eval semantics only here.

    # AdaptiveAvgPool1d(1): lane-axis mean -> (8, 1), already channel-major,
    # so fc_mu is a VPU multiply + sublane reduce (no transpose, no MXU op).
    z = jnp.mean(y, axis=1, keepdims=True)                      # (8, 1)
    mu = jnp.sum(w_fc * z, axis=0, keepdims=True) + b_fc        # (1, 1)
    out_ref[...] = mu.astype(out_ref.dtype)


def pack_params(params):
    """Fold BatchNorm into the conv and pack everything into one (8, 128) tile.

    Call ONCE per model (not per forward): replaces ~10 tiny per-call XLA ops
    and a fresh HBM parameter write with a single cached, vreg-aligned array.
    """
    gamma = params['bn_gamma'].reshape(C_OUT).astype(jnp.float32)
    beta = params['bn_beta'].reshape(C_OUT).astype(jnp.float32)
    mean = params['bn_mean'].reshape(C_OUT).astype(jnp.float32)
    var = params['bn_var'].reshape(C_OUT).astype(jnp.float32)

    scale = gamma * jax.lax.rsqrt(var + BN_EPS)                 # (C_OUT,)
    shift = beta - mean * scale                                 # (C_OUT,)

    w_folded = params['w_conv'].astype(jnp.float32) * scale[:, None, None]

    p = jnp.zeros((P_ROWS, P_COLS), jnp.float32)
    for k in range(K):
        p = p.at[:C_OUT, k * C_IN:(k + 1) * C_IN].set(w_folded[:, :, k])
    p = p.at[:C_OUT, _B_COL].set(shift)
    p = p.at[:C_OUT, _WFC_COL].set(params['w_fc'].reshape(C_OUT).astype(jnp.float32))
    p = p.at[0, _BFC_COL].set(params['b_fc'].reshape(()).astype(jnp.float32))
    return p


@jax.jit
def debug_respr_mc_dropout_cnn(x, packed_params):
    """x: (B, C_IN, L) float32 NCL (like PyTorch Conv1d). Returns mu: (B, 1)."""
    B, C, L = x.shape
    assert C == C_IN

    # HBM-bound at scale (~9 flops/byte); advisory cost for the XLA scheduler.
    flops = B * (2 * K * P_ROWS * C_IN * L + 4 * P_ROWS * L)
    bytes_accessed = x.size * 4 + P_ROWS * P_COLS * 4 + B * 4

    # Grid over the batch: "parallel" lets the runtime shard batches across
    # v7x's two TensorCores and double-buffer the per-sample blocks.
    # TODO(synk): for large L, add an "arbitrary" L-axis grid with a pooling
    # accumulator (pl.when init/finalize) and size tiles against the scoped
    # VMEM limit (16 MiB v5e / 32 MiB v6e-v7x default) via vmem_limit_bytes.
    out = pl.pallas_call(
        _forward_kernel,
        out_shape=jax.ShapeDtypeStruct((B, 1, 1), jnp.float32),
        grid=(B,),
        in_specs=[
            pl.BlockSpec((None, C_IN, L), lambda b: (b, 0, 0)),   # per-batch x
            pl.BlockSpec((P_ROWS, P_COLS), lambda b: (0, 0)),     # resident params
        ],
        out_specs=pl.BlockSpec((None, 1, 1), lambda b: (b, 0, 0)),
        compiler_params=pltpu.CompilerParams(
            dimension_semantics=("parallel",)),
        cost_estimate=pl.CostEstimate(
            flops=flops, transcendentals=0, bytes_accessed=bytes_accessed),
    )(x.astype(jnp.float32), packed_params)
    return out.reshape(B, 1)


def _reference(x, params):
    """Pure-JAX eval-mode reference of the PyTorch module."""
    conv = jax.lax.conv_general_dilated(
        x, params['w_conv'], window_strides=(1,), padding=((PAD, PAD),),
        dimension_numbers=('NCH', 'OIH', 'NCH'))
    g = params['bn_gamma'].reshape(1, C_OUT, 1)
    b = params['bn_beta'].reshape(1, C_OUT, 1)
    m = params['bn_mean'].reshape(1, C_OUT, 1)
    v = params['bn_var'].reshape(1, C_OUT, 1)
    y = jnp.maximum((conv - m) * g * jax.lax.rsqrt(v + BN_EPS) + b, 0.0)
    z = jnp.mean(y, axis=2)                                     # (B, C_OUT)
    return z @ params['w_fc'].T + params['b_fc']                # (B, 1)


if __name__ == "__main__":
    key = jax.random.PRNGKey(0)
    kx, kw, kfw, kg, kb, km, kv, kfb = jax.random.split(key, 8)

    B, L = 2, 16
    x = jax.random.normal(kx, (B, C_IN, L), dtype=jnp.float32)

    # Deterministic synthetic parameters; non-trivial BN stats so the
    # BN-folding path is actually exercised by the reference check.
    params = {
        'w_conv': jax.random.normal(kw, (C_OUT, C_IN, K), jnp.float32)
                  / jnp.sqrt(float(C_IN * K)),
        'bn_gamma': 0.5 + jax.random.uniform(kg, (C_OUT, 1), dtype=jnp.float32),
        'bn_beta': 0.1 * jax.random.normal(kb, (C_OUT, 1), jnp.float32),
        'bn_mean': 0.1 * jax.random.normal(km, (C_OUT, 1), jnp.float32),
        'bn_var': 0.5 + jax.random.uniform(kv, (C_OUT, 1), dtype=jnp.float32),
        'w_fc': jax.random.normal(kfw, (1, C_OUT), jnp.float32)
                / jnp.sqrt(float(C_OUT)),
        'b_fc': 0.1 * jax.random.normal(kfb, (1, 1), jnp.float32),
    }

    packed = pack_params(params)          # once per model, not per call
    mu = debug_respr_mc_dropout_cnn(x, packed)
    jax.block_until_ready(mu)
    assert mu.shape == (B, 1) and mu.dtype == jnp.float32

    ref = _reference(x, params)
    max_err = float(jnp.max(jnp.abs(mu - ref)))
    assert max_err < 1e-3, f"mismatch vs reference: max_err={max_err}"
    print("KERNEL_OK")
</pallas_src>

<mosaic_0001>
module attributes {stable_mosaic.version = 11 : i64} {
  func.func @_forward_kernel(%arg0: i32, %arg1: memref<1x4x16xf32, #tpu.memory_space<vmem>>, %arg2: memref<8x128xf32, #tpu.memory_space<vmem>>, %arg3: memref<1x1x1xf32, #tpu.memory_space<vmem>>) attributes {dimension_semantics = [#tpu.dimension_semantics<parallel>], iteration_bounds = array<i64: 2>, scalar_prefetch = 0 : i64, scratch_operands = 0 : i64, tpu.core_type = #tpu.core_type<tc>, window_params = [{transform_indices = @transform_0, window_bounds = array<i64: 1, 4, 16>}, {pipeline_mode = #tpu.pipeline_mode<synchronous>, transform_indices = @transform_1, window_bounds = array<i64: 8, 128>}, {transform_indices = @transform_2, window_bounds = array<i64: 1, 1, 1>}]} {
    %c0 = arith.constant 0 : index
    %c0_0 = arith.constant 0 : index
    %c0_1 = arith.constant 0 : index
    %0 = vector.load %arg1[%c0, %c0_0, %c0_1] : memref<1x4x16xf32, #tpu.memory_space<vmem>>, vector<1x4x16xf32>
    %1 = vector.shape_cast %0 : vector<1x4x16xf32> to vector<4x16xf32>
    %c0_2 = arith.constant 0 : index
    %c0_3 = arith.constant 0 : index
    %2 = vector.load %arg2[%c0_2, %c0_3] : memref<8x128xf32, #tpu.memory_space<vmem>>, vector<8x128xf32>
    %3 = vector.extract_strided_slice %2 {offsets = [0, 0], sizes = [8, 4], strides = [1, 1]} : vector<8x128xf32> to vector<8x4xf32>
    %4 = vector.extract_strided_slice %2 {offsets = [0, 4], sizes = [8, 4], strides = [1, 1]} : vector<8x128xf32> to vector<8x4xf32>
    %5 = vector.extract_strided_slice %2 {offsets = [0, 8], sizes = [8, 4], strides = [1, 1]} : vector<8x128xf32> to vector<8x4xf32>
    %6 = vector.extract_strided_slice %2 {offsets = [0, 12], sizes = [8, 1], strides = [1, 1]} : vector<8x128xf32> to vector<8x1xf32>
    %7 = vector.extract_strided_slice %2 {offsets = [0, 13], sizes = [8, 1], strides = [1, 1]} : vector<8x128xf32> to vector<8x1xf32>
    %8 = vector.extract_strided_slice %2 {offsets = [0, 14], sizes = [1, 1], strides = [1, 1]} : vector<8x128xf32> to vector<1x1xf32>
    %cst = arith.constant 0.000000e+00 : f32
    %9 = vector.broadcast %cst : f32 to vector<4x1xf32>
    %10 = vector.extract_strided_slice %1 {offsets = [0, 0], sizes = [4, 15], strides = [1, 1]} : vector<4x16xf32> to vector<4x15xf32>
    %11 = tpu.concatenate %9, %10 in 1 : vector<4x1xf32>, vector<4x15xf32> -> vector<4x16xf32>
    %12 = vector.extract_strided_slice %1 {offsets = [0, 1], sizes = [4, 15], strides = [1, 1]} : vector<4x16xf32> to vector<4x15xf32>
    %13 = tpu.concatenate %12, %9 in 1 : vector<4x15xf32>, vector<4x1xf32> -> vector<4x16xf32>
    %cst_4 = arith.constant dense<0.000000e+00> : vector<8x16xf32>
    %14 = tpu.matmul %4, %1, %cst_4 {dimension_numbers = #tpu.dot_dimension_numbers<[1], [0], [0], [1], [0, 0, 1, 1], [], []>} : vector<8x4xf32>, vector<4x16xf32>, vector<8x16xf32> -> vector<8x16xf32>
    %cst_5 = arith.constant dense<0.000000e+00> : vector<8x16xf32>
    %15 = tpu.matmul %3, %11, %cst_5 {dimension_numbers = #tpu.dot_dimension_numbers<[1], [0], [0], [1], [0, 0, 1, 1], [], []>} : vector<8x4xf32>, vector<4x16xf32>, vector<8x16xf32> -> vector<8x16xf32>
    %16 = arith.addf %14, %15 : vector<8x16xf32>
    %cst_6 = arith.constant dense<0.000000e+00> : vector<8x16xf32>
    %17 = tpu.matmul %5, %13, %cst_6 {dimension_numbers = #tpu.dot_dimension_numbers<[1], [0], [0], [1], [0, 0, 1, 1], [], []>} : vector<8x4xf32>, vector<4x16xf32>, vector<8x16xf32> -> vector<8x16xf32>
    %18 = arith.addf %16, %17 : vector<8x16xf32>
    %19 = vector.broadcast %6 : vector<8x1xf32> to vector<8x16xf32>
    %20 = arith.addf %18, %19 : vector<8x16xf32>
    %cst_7 = arith.constant 0.000000e+00 : f32
    %21 = vector.broadcast %cst_7 : f32 to vector<8x16xf32>
    %22 = arith.maximumf %20, %21 : vector<8x16xf32>
    %cst_8 = arith.constant dense<0.000000e+00> : vector<8xf32>
    %23 = vector.multi_reduction <add>, %22, %cst_8 [1] : vector<8x16xf32> to vector<8xf32>
    %24 = vector.shape_cast %23 : vector<8xf32> to vector<8x1xf32>
    %cst_9 = arith.constant 1.600000e+01 : f32
    %25 = vector.broadcast %cst_9 : f32 to vector<8x1xf32>
    %26 = arith.divf %24, %25 : vector<8x1xf32>
    %27 = arith.mulf %7, %26 : vector<8x1xf32>
    %cst_10 = arith.constant dense<0.000000e+00> : vector<1xf32>
    %28 = vector.multi_reduction <add>, %27, %cst_10 [0] : vector<8x1xf32> to vector<1xf32>
    %29 = vector.shape_cast %28 : vector<1xf32> to vector<1x1xf32>
    %30 = arith.addf %29, %8 : vector<1x1xf32>
    %c0_11 = arith.constant 0 : index
    %c0_12 = arith.constant 0 : index
    %c0_13 = arith.constant 0 : index
    %31 = vector.load %arg3[%c0_11, %c0_12, %c0_13] : memref<1x1x1xf32, #tpu.memory_space<vmem>>, vector<1x1x1xf32>
    %32 = vector.shape_cast %31 : vector<1x1x1xf32> to vector<1x1xf32>
    %33 = vector.shape_cast %30 : vector<1x1xf32> to vector<1x1x1xf32>
    tpu.vector_store %arg3[%c0_11, %c0_12, %c0_13], %33 {strides = array<i32>} : memref<1x1x1xf32, #tpu.memory_space<vmem>>, vector<1x1x1xf32>,
    return
  }
  func.func @transform_0(%arg0: i32) -> (i32, i32, i32) {
    %c0_i32 = arith.constant 0 : i32
    %c0_i32_0 = arith.constant 0 : i32
    %c0_i32_1 = arith.constant 0 : i32
    return %arg0, %c0_i32, %c0_i32_0 : i32, i32, i32
  }
  func.func @transform_1(%arg0: i32) -> (i32, i32) {
    %c0_i32 = arith.constant 0 : i32
    %c0_i32_0 = arith.constant 0 : i32
    %c0_i32_1 = arith.constant 0 : i32
    return %c0_i32, %c0_i32_0 : i32, i32
  }
  func.func @transform_2(%arg0: i32) -> (i32, i32, i32) {
    %c0_i32 = arith.constant 0 : i32
    %c0_i32_0 = arith.constant 0 : i32
    %c0_i32_1 = arith.constant 0 : i32
    return %arg0, %c0_i32, %c0_i32_0 : i32, i32, i32
  }
}

</mosaic_0001>

<llo_original>
// kernel: debug_respr_mc_dropout_cnn.1
$region0: #{debug_respr_mc_dropout_cnn.1}
  #allocation0 [shape = 'u32[]', space=smem, size = 0x4, offset = 0x4, fixed_abs, tag = 'smem constant byte address 0x4 - core index']
  #allocation1 [shape = 'u32[144,128]{1,0:T(1,128)}', space=vmem, size = 0x12000, scoped, tag = 'internal scratch']
  %s0 = inlined_call_operand.hbm [shape: f32[2,4,16], index: 0, kind: input, shape index: {}]
  %s1 = inlined_call_operand.hbm [shape: f32[8,128], index: 1, kind: input, shape index: {}]
  %s2 = inlined_call_operand.vmem [shape: f32[2,1,1], index: 2, kind: output, shape index: {}]
  %s3 = sld [smem:[#allocation0]]
  $region49: #{debug_respr_mc_dropout_cnn.1} parent=0
    _
  %s5 = ssub.s32 1, %s3
  %s6 = scalar_select 0, %s5, %s3
  $region1: #{debug_respr_mc_dropout_cnn.1} parent=0
    #allocation2 [shape = 'u8[4096]{0}', space=vmem, size = 0x1000, scoped, tag = 'input window, operand 0']
    #allocation3 [shape = 's32[2]{0}', space=sflag, size = 0x8, scoped, tag = 'scoped memory for debug_respr_mc_dropout_cnn.1']
    #allocation4 [shape = 'u8[4096]{0}', space=vmem, size = 0x1000, scoped, tag = 'input window, operand 1, single buffered']
    #allocation5 [shape = 's32[1]{0}', space=sflag, size = 0x4, scoped, tag = 'scoped memory for debug_respr_mc_dropout_cnn.1']
    %7 = vsyncpa [#allocation3], 0
    %s8 = scalar_lea.sflag [#allocation3], 1
    %9 = vsyncpa %s8, 0
    %10 = vsyncpa [#allocation5], 0
    loop: start=0, step=1, limit=4
    $region2: #{debug_respr_mc_dropout_cnn.1} parent=1 // loop_pre_header
      _
    $region3: #{debug_respr_mc_dropout_cnn.1} parent=1 // loop_header
      %s12 = sphi 0, %s16
      %p13 = scmp.ge.s32.totalorder %s12, 4
      %s22 = sphi 0, %s24
      %s25 = sphi 0, %s22
      %s26 = sphi 0, %s25
      %s42 = sphi 0, %s26
      %s46 = sphi 0, %s46
      %s48 = sphi 0, %s46
      %s49 = sphi 0, %s48
      %s63 = sphi 0, %s49
      %s69 = sphi 0, %s71
      %s72 = sphi 0, %s69
      %s73 = sphi 0, %s72
      %s89 = sphi 0, %s73
    $region4: #{debug_respr_mc_dropout_cnn.1} parent=1 // loop_header_branch
      %15 = sbr.rel (%p13) target = $region8
    $region5: #{debug_respr_mc_dropout_cnn.1} parent=1 // loop_body
      %s17 = ssub.s32 %s12, 1
      %s18 = ssub.s32 %s12, 2
      %s19 = sadd.s32 %s12, 1
      %s20 = ssub.s32 %s12, %s19
      %p21 = scmp.eq.s32.totalorder %s20, 0
      %s23 = sadd.s32 %s22, 1
      %s24 = scalar_select %p21, %s22, %s23
      %p27 = pneg %p21
      %p28 = scmp.eq.s32.totalorder %s12, 1
      %p29 = por %p27, %p28
      %p30 = scmp.ne.s32.totalorder %s22, %s25
      %p31 = scmp.eq.s32.totalorder %s12, 0
      %p32 = por %p30, %p31
      %p33 = scmp.ne.s32.totalorder %s22, %s25
      %p34 = scmp.eq.s32.totalorder %s17, 1
      %p35 = por %p33, %p34
      %p36 = scmp.ne.s32.totalorder %s25, %s26
      %p37 = scmp.eq.s32.totalorder %s17, 0
      %p38 = por %p36, %p37
      %p39 = scmp.ne.s32.totalorder %s25, %s26
      %p40 = scmp.eq.s32.totalorder %s18, 1
      %p41 = por %p39, %p40
      %p43 = scmp.ne.s32.totalorder %s26, %s42
      %p44 = scmp.eq.s32.totalorder %s18, 0
      %p45 = por %p43, %p44
      %s47 = sadd.s32 %s46, 1
      %p50 = scmp.eq.s32.totalorder %s12, 1
      %p51 = scmp.ne.s32.totalorder %s46, %s48
      %p52 = scmp.eq.s32.totalorder %s12, 0
      %p53 = por %p51, %p52
      %p54 = scmp.ne.s32.totalorder %s46, %s48
      %p55 = scmp.eq.s32.totalorder %s17, 1
      %p56 = por %p54, %p55
      %p57 = scmp.ne.s32.totalorder %s48, %s49
      %p58 = scmp.eq.s32.totalorder %s17, 0
      %p59 = por %p57, %p58
      %p60 = scmp.ne.s32.totalorder %s48, %s49
      %p61 = scmp.eq.s32.totalorder %s18, 1
      %p62 = por %p60, %p61
      %p64 = scmp.ne.s32.totalorder %s49, %s63
      %p65 = scmp.eq.s32.totalorder %s18, 0
      %p66 = por %p64, %p65
      %s67 = ssub.s32 %s12, %s19
      %p68 = scmp.eq.s32.totalorder %s67, 0
      %s70 = sadd.s32 %s69, 1
      %s71 = scalar_select %p68, %s69, %s70
      %p74 = pneg %p68
      %p75 = scmp.eq.s32.totalorder %s12, 1
      %p76 = por %p74, %p75
      %p77 = scmp.ne.s32.totalorder %s69, %s72
      %p78 = scmp.eq.s32.totalorder %s12, 0
      %p79 = por %p77, %p78
      %p80 = scmp.ne.s32.totalorder %s69, %s72
      %p81 = scmp.eq.s32.totalorder %s17, 1
      %p82 = por %p80, %p81
      %p83 = scmp.ne.s32.totalorder %s72, %s73
      %p84 = scmp.eq.s32.totalorder %s17, 0
      %p85 = por %p83, %p84
      %p86 = scmp.ne.s32.totalorder %s72, %s73
      %p87 = scmp.eq.s32.totalorder %s18, 1
      %p88 = por %p86, %p87
      %p90 = scmp.ne.s32.totalorder %s73, %s89
      %p91 = scmp.eq.s32.totalorder %s18, 0
      %p92 = por %p90, %p91
      %p93 = scmp.le.s32.totalorder 1, %s12
      %p94 = scmp.lt.s32.totalorder %s12, 3
      %p95 = pnand %p93, %p94
      %p96 = pneg %p95
      // Predicated region
      $region9: #{debug_respr_mc_dropout_cnn.1} parent=5 // pred_check
        _
      $region10: #{debug_respr_mc_dropout_cnn.1} parent=5 // pred_check_branch
        %98 = sbr.rel (%p95) target = $region12
      $region11: #{debug_respr_mc_dropout_cnn.1} parent=5 // pred_region
        %s99 = ssub.s32 %s12, 1
        // Predicated region
        $region13: #{debug_respr_mc_dropout_cnn.1} parent=11 // pred_check
          %p100 = pneg %p59
        $region14: #{debug_respr_mc_dropout_cnn.1} parent=11 // pred_check_branch
          %102 = sbr.rel (%p100) target = $region16
        $region15: #{debug_respr_mc_dropout_cnn.1} parent=11 // pred_region
          %s104 = ssub.s32 128, 128
          %105 = vsyncadd [#allocation5], %s104
          %s107 = sshll.u32 [#allocation4], 4
          %s108 = int_to_ptr.vmem [resolvable:$true] %s107
          %110 = dma.hbm_to_vmem [thread:$0]  %s1, 128, %s108, [#allocation5]
        $region16: #{debug_respr_mc_dropout_cnn.1} parent=11 // pred_fallthru
          _
      $region12: #{debug_respr_mc_dropout_cnn.1} parent=5 // pred_fallthru
        _
      %p111 = scmp.lt.s32.totalorder %s12, 2
      // Predicated region
      $region17: #{debug_respr_mc_dropout_cnn.1} parent=5 // pred_check
        %p112 = pneg %p111
      $region18: #{debug_respr_mc_dropout_cnn.1} parent=5 // pred_check_branch
        %114 = sbr.rel (%p112) target = $region20
      $region19: #{debug_respr_mc_dropout_cnn.1} parent=5 // pred_region
        // Predicated region
        $region21: #{debug_respr_mc_dropout_cnn.1} parent=19 // pred_check
          %p115 = pneg %p32
        $region22: #{debug_respr_mc_dropout_cnn.1} parent=19 // pred_check_branch
          %117 = sbr.rel (%p115) target = $region24
        $region23: #{debug_respr_mc_dropout_cnn.1} parent=19 // pred_region
          %s118 = sand.u32 %s22, 1
          %s119 = scalar_lea.sflag [#allocation3], %s118
          %s120 = sand.u32 %s22, 1
          %s121 = smul.addr %s120, 4
          %s122 = scalar_lea.vmem [#allocation2], %s121
          %s124 = ssub.s32 64, 64
          %125 = vsyncadd %s119, %s124
          %s126 = smul.addr %s12, 64
          %s127 = scalar_lea.hbm %s0, %s126
          %s129 = sshll.u32 %s122, 4
          %s130 = int_to_ptr.vmem [resolvable:$true] %s129
          %132 = dma.hbm_to_vmem [thread:$0]  %s127, 64, %s130, %s119
        $region24: #{debug_respr_mc_dropout_cnn.1} parent=19 // pred_fallthru
          _
      $region20: #{debug_respr_mc_dropout_cnn.1} parent=5 // pred_fallthru
        _
      %p133 = scmp.le.s32.totalorder 1, %s12
      %p134 = scmp.lt.s32.totalorder %s12, 3
      %p135 = pnand %p133, %p134
      %p136 = pneg %p135
      // Predicated region
      $region25: #{debug_respr_mc_dropout_cnn.1} parent=5 // pred_check
        _
      $region26: #{debug_respr_mc_dropout_cnn.1} parent=5 // pred_check_branch
        %138 = sbr.rel (%p135) target = $region28
      $region27: #{debug_respr_mc_dropout_cnn.1} parent=5 // pred_region
        %s139 = ssub.s32 %s12, 1
        %s140 = sand.u32 %s25, 1
        %s141 = scalar_lea.sflag [#allocation3], %s140
        %s142 = sand.u32 %s25, 1
        %s143 = smul.addr %s142, 4
        %s144 = scalar_lea.vmem [#allocation2], %s143
        // Predicated region
        $region29: #{debug_respr_mc_dropout_cnn.1} parent=27 // pred_check
          %p145 = pneg %p38
        $region30: #{debug_respr_mc_dropout_cnn.1} parent=27 // pred_check_branch
          %147 = sbr.rel (%p145) target = $region32
        $region31: #{debug_respr_mc_dropout_cnn.1} parent=27 // pred_region
          %148 = dma.done %s141, 64
        $region32: #{debug_respr_mc_dropout_cnn.1} parent=27 // pred_fallthru
          _
        // Predicated region
        $region33: #{debug_respr_mc_dropout_cnn.1} parent=27 // pred_check
          %p149 = pneg %p59
        $region34: #{debug_respr_mc_dropout_cnn.1} parent=27 // pred_check_branch
          %151 = sbr.rel (%p149) target = $region36
        $region35: #{debug_respr_mc_dropout_cnn.1} parent=27 // pred_region
          %152 = dma.done [#allocation5], 128
        $region36: #{debug_respr_mc_dropout_cnn.1} parent=27 // pred_fallthru
          _
        %s153 = sand.u32 %s25, 1
        %s154 = scalar_lea.sflag [#allocation3], %s153
        %s155 = sand.u32 %s25, 1
        %s156 = smul.addr %s155, 4
        %s157 = scalar_lea.vmem [#allocation2], %s156
        %p158 = pneg %p38
        %p159 = pneg %p35
        %p160 = pneg %p59
        %p161 = pneg %p56
        %p162 = pneg %p85
        %p163 = pneg %p82
        %p164 = scmp.lt.s32.totalorder %s17, 1
        %s165 = scalar_select %p164, %s17, 1
        %s166 = scalar_lea.vmem %s2, %s165
        %p167 = scmp.lt.s32.totalorder %s17, 1
        %s168 = scalar_select %p167, %s17, 1
        %s169 = scalar_lea.vmem %s2, %s168
        %v170 = vld [vmem:[%s144] sm:$0xf]
        %v171 = vld [vmem:[#allocation4] sm:$0xff]
        %173 = vrot.lane.b32.xlu0 %v170, 1
        %v174 = vpop.permute.xlu0 %173
        %vm176 = vcmask 7168
        %v177 = vsel %vm176, 0.0, %v174
        %178 = vrot.lane.b32.xlu0 %v170, 127
        %v179 = vpop.permute.xlu0 %178
        %vm181 = vcmask 121856
        %v182 = vsel %vm181, %v179, 0.0
        %vm183 = vcmask 31744
        %v185 = vsel %vm183, %v171, 0
        %vm187 = vcmask 1043456
        %v189 = vsel %vm187, %v177, 0
        %191 = vmatprep.subr.mxu0 0.0
        %192 = vmatpush1.msra.mxu0 0.0
        %193 = vmatprep.subr.mxu0 0.0
        %194 = vmatpush1.msra.mxu0 0.0
        %195 = vmatprep.subr.mxu0 0.0
        %196 = vmatpush1.msra.mxu0 0.0
        %197 = vmatprep.subr.mxu0 0.0
        %198 = vmatpush1.msra.mxu0 0.0
        %199 = vmatprep.subr.mxu0 0.0
        %200 = vmatpush1.msra.mxu0 0.0
        %201 = vmatprep.subr.mxu0 0.0
        %202 = vmatpush1.msra.mxu0 0.0
        %203 = vmatprep.subr.mxu0 0.0
        %204 = vmatpush1.msra.mxu0 0.0
        %205 = vmatprep.subr.mxu0 0.0
        %206 = vmatpush1.msra.mxu0 0.0
        %207 = vmatprep.subr.mxu0 0.0
        %208 = vmatpush1.msra.mxu0 0.0
        %209 = vmatprep.subr.mxu0 0.0
        %210 = vmatpush1.msra.mxu0 0.0
        %211 = vmatprep.subr.mxu0 0.0
        %212 = vmatpush1.msra.mxu0 0.0
        %213 = vmatprep.subr.mxu0 0.0
        %214 = vmatpush1.msra.mxu0 0.0
        %215 = vmatprep.subr.mxu0 0.0
        %216 = vmatpush1.msra.mxu0 0.0
        %217 = vmatprep.subr.mxu0 0.0
        %218 = vmatpush1.msra.mxu0 0.0
        %219 = vmatprep.subr.mxu0 0.0
        %220 = vmatpush1.msra.mxu0 0.0
        %221 = vmatprep.subr.mxu0 0.0
        %222 = vmatpush1.msra.mxu0 %v189
        %223 = vmatprep.subr.mxu0 0.0
        %224 = vmatpush2.msra.mxu0 0.0
        %225 = vmatprep.subr.mxu0 0.0
        %226 = vmatpush2.msra.mxu0 0.0
        %227 = vmatprep.subr.mxu0 0.0
        %228 = vmatpush2.msra.mxu0 0.0
        %229 = vmatprep.subr.mxu0 0.0
        %230 = vmatpush2.msra.mxu0 0.0
        %231 = vmatprep.subr.mxu0 0.0
        %232 = vmatpush2.msra.mxu0 0.0
        %233 = vmatprep.subr.mxu0 0.0
        %234 = vmatpush2.msra.mxu0 0.0
        %235 = vmatprep.subr.mxu0 0.0
        %236 = vmatpush2.msra.mxu0 0.0
        %237 = vmatprep.subr.mxu0 0.0
        %238 = vmatpush2.msra.mxu0 0.0
        %239 = vmatprep.subr.mxu0 0.0
        %240 = vmatpush2.msra.mxu0 0.0
        %241 = vmatprep.subr.mxu0 0.0
        %242 = vmatpush2.msra.mxu0 0.0
        %243 = vmatprep.subr.mxu0 0.0
        %244 = vmatpush2.msra.mxu0 0.0
        %245 = vmatprep.subr.mxu0 0.0
        %246 = vmatpush2.msra.mxu0 0.0
        %247 = vmatprep.subr.mxu0 0.0
        %248 = vmatpush2.msra.mxu0 0.0
        %249 = vmatprep.subr.mxu0 0.0
        %250 = vmatpush2.msra.mxu0 0.0
        %251 = vmatprep.subr.mxu0 0.0
        %252 = vmatpush2.msra.mxu0 0.0
        %253 = vmatprep.subr.mxu0 0.0
        %254 = vmatpush2.msra.mxu0 0.0
        %255 = vmatprep.mubr.f32.mxu0 0.0
        %256 = vmatmul.mubr.f32.gmra.mxu0 %v185
        %v257 = vpop.f32.mrf.mxu0
        %v258 = vadd.f32 0.0, %v257
        %v259 = vpop.f32.mrf.mxu0
        %260 = vdwg.mxu0
        %261 = vrot.lane.b32.xlu0 %v171, 124
        %v262 = vpop.permute.xlu0 %261
        %v263 = vsel %vm183, %v262, 0
        %v265 = vsel %vm187, %v170, 0
        %267 = vmatprep.subr.mxu0 0.0
        %268 = vmatpush1.msra.mxu0 0.0
        %269 = vmatprep.subr.mxu0 0.0
        %270 = vmatpush1.msra.mxu0 0.0
        %271 = vmatprep.subr.mxu0 0.0
        %272 = vmatpush1.msra.mxu0 0.0
        %273 = vmatprep.subr.mxu0 0.0
        %274 = vmatpush1.msra.mxu0 0.0
        %275 = vmatprep.subr.mxu0 0.0
        %276 = vmatpush1.msra.mxu0 0.0
        %277 = vmatprep.subr.mxu0 0.0
        %278 = vmatpush1.msra.mxu0 0.0
        %279 = vmatprep.subr.mxu0 0.0
        %280 = vmatpush1.msra.mxu0 0.0
        %281 = vmatprep.subr.mxu0 0.0
        %282 = vmatpush1.msra.mxu0 0.0
        %283 = vmatprep.subr.mxu0 0.0
        %284 = vmatpush1.msra.mxu0 0.0
        %285 = vmatprep.subr.mxu0 0.0
        %286 = vmatpush1.msra.mxu0 0.0
        %287 = vmatprep.subr.mxu0 0.0
        %288 = vmatpush1.msra.mxu0 0.0
        %289 = vmatprep.subr.mxu0 0.0
        %290 = vmatpush1.msra.mxu0 0.0
        %291 = vmatprep.subr.mxu0 0.0
        %292 = vmatpush1.msra.mxu0 0.0
        %293 = vmatprep.subr.mxu0 0.0
        %294 = vmatpush1.msra.mxu0 0.0
        %295 = vmatprep.subr.mxu0 0.0
        %296 = vmatpush1.msra.mxu0 0.0
        %297 = vmatprep.subr.mxu0 0.0
        %298 = vmatpush1.msra.mxu0 %v265
        %299 = vmatprep.subr.mxu0 0.0
        %300 = vmatpush2.msra.mxu0 0.0
        %301 = vmatprep.subr.mxu0 0.0
        %302 = vmatpush2.msra.mxu0 0.0
        %303 = vmatprep.subr.mxu0 0.0
        %304 = vmatpush2.msra.mxu0 0.0
        %305 = vmatprep.subr.mxu0 0.0
        %306 = vmatpush2.msra.mxu0 0.0
        %307 = vmatprep.subr.mxu0 0.0
        %308 = vmatpush2.msra.mxu0 0.0
        %309 = vmatprep.subr.mxu0 0.0
        %310 = vmatpush2.msra.mxu0 0.0
        %311 = vmatprep.subr.mxu0 0.0
        %312 = vmatpush2.msra.mxu0 0.0
        %313 = vmatprep.subr.mxu0 0.0
        %314 = vmatpush2.msra.mxu0 0.0
        %315 = vmatprep.subr.mxu0 0.0
        %316 = vmatpush2.msra.mxu0 0.0
        %317 = vmatprep.subr.mxu0 0.0
        %318 = vmatpush2.msra.mxu0 0.0
        %319 = vmatprep.subr.mxu0 0.0
        %320 = vmatpush2.msra.mxu0 0.0
        %321 = vmatprep.subr.mxu0 0.0
        %322 = vmatpush2.msra.mxu0 0.0
        %323 = vmatprep.subr.mxu0 0.0
        %324 = vmatpush2.msra.mxu0 0.0
        %325 = vmatprep.subr.mxu0 0.0
        %326 = vmatpush2.msra.mxu0 0.0
        %327 = vmatprep.subr.mxu0 0.0
        %328 = vmatpush2.msra.mxu0 0.0
        %329 = vmatprep.subr.mxu0 0.0
        %330 = vmatpush2.msra.mxu0 0.0
        %331 = vmatprep.mubr.f32.mxu0 0.0
        %332 = vmatmul.mubr.f32.gmra.mxu0 %v263
        %v333 = vpop.f32.mrf.mxu0
        %v334 = vadd.f32 %v258, %v333
        %v335 = vpop.f32.mrf.mxu0
        %336 = vdwg.mxu0
        %337 = vrot.lane.b32.xlu0 %v171, 120
        %v338 = vpop.permute.xlu0 %337
        %v339 = vsel %vm183, %v338, 0
        %v342 = vsel %vm187, %v182, 0
        %344 = vmatprep.subr.mxu0 0.0
        %345 = vmatpush1.msra.mxu0 0.0
        %346 = vmatprep.subr.mxu0 0.0
        %347 = vmatpush1.msra.mxu0 0.0
        %348 = vmatprep.subr.mxu0 0.0
        %349 = vmatpush1.msra.mxu0 0.0
        %350 = vmatprep.subr.mxu0 0.0
        %351 = vmatpush1.msra.mxu0 0.0
        %352 = vmatprep.subr.mxu0 0.0
        %353 = vmatpush1.msra.mxu0 0.0
        %354 = vmatprep.subr.mxu0 0.0
        %355 = vmatpush1.msra.mxu0 0.0
        %356 = vmatprep.subr.mxu0 0.0
        %357 = vmatpush1.msra.mxu0 0.0
        %358 = vmatprep.subr.mxu0 0.0
        %359 = vmatpush1.msra.mxu0 0.0
        %360 = vmatprep.subr.mxu0 0.0
        %361 = vmatpush1.msra.mxu0 0.0
        %362 = vmatprep.subr.mxu0 0.0
        %363 = vmatpush1.msra.mxu0 0.0
        %364 = vmatprep.subr.mxu0 0.0
        %365 = vmatpush1.msra.mxu0 0.0
        %366 = vmatprep.subr.mxu0 0.0
        %367 = vmatpush1.msra.mxu0 0.0
        %368 = vmatprep.subr.mxu0 0.0
        %369 = vmatpush1.msra.mxu0 0.0
        %370 = vmatprep.subr.mxu0 0.0
        %371 = vmatpush1.msra.mxu0 0.0
        %372 = vmatprep.subr.mxu0 0.0
        %373 = vmatpush1.msra.mxu0 0.0
        %374 = vmatprep.subr.mxu0 0.0
        %375 = vmatpush1.msra.mxu0 %v342
        %376 = vmatprep.subr.mxu0 0.0
        %377 = vmatpush2.msra.mxu0 0.0
        %378 = vmatprep.subr.mxu0 0.0
        %379 = vmatpush2.msra.mxu0 0.0
        %380 = vmatprep.subr.mxu0 0.0
        %381 = vmatpush2.msra.mxu0 0.0
        %382 = vmatprep.subr.mxu0 0.0
        %383 = vmatpush2.msra.mxu0 0.0
        %384 = vmatprep.subr.mxu0 0.0
        %385 = vmatpush2.msra.mxu0 0.0
        %386 = vmatprep.subr.mxu0 0.0
        %387 = vmatpush2.msra.mxu0 0.0
        %388 = vmatprep.subr.mxu0 0.0
        %389 = vmatpush2.msra.mxu0 0.0
        %390 = vmatprep.subr.mxu0 0.0
        %391 = vmatpush2.msra.mxu0 0.0
        %392 = vmatprep.subr.mxu0 0.0
        %393 = vmatpush2.msra.mxu0 0.0
        %394 = vmatprep.subr.mxu0 0.0
        %395 = vmatpush2.msra.mxu0 0.0
        %396 = vmatprep.subr.mxu0 0.0
        %397 = vmatpush2.msra.mxu0 0.0
        %398 = vmatprep.subr.mxu0 0.0
        %399 = vmatpush2.msra.mxu0 0.0
        %400 = vmatprep.subr.mxu0 0.0
        %401 = vmatpush2.msra.mxu0 0.0
        %402 = vmatprep.subr.mxu0 0.0
        %403 = vmatpush2.msra.mxu0 0.0
        %404 = vmatprep.subr.mxu0 0.0
        %405 = vmatpush2.msra.mxu0 0.0
        %406 = vmatprep.subr.mxu0 0.0
        %407 = vmatpush2.msra.mxu0 0.0
        %408 = vmatprep.mubr.f32.mxu0 0.0
        %409 = vmatmul.mubr.f32.gmra.mxu0 %v339
        %v410 = vpop.f32.mrf.mxu0
        %v411 = vadd.f32 0.0, %v410
        %v412 = vpop.f32.mrf.mxu0
        %413 = vdwg.mxu0
        %v414 = vadd.f32 %v334, %v411
        %415 = vset.pattern.permute.xlu0 12
        %416 = vperm.xlu0 %415, %v171
        %v417 = vpop.permute.xlu0 %416
        %v419 = vadd.f32 %v414, %v417
        %v420 = vmax.f32 %v419, 0.0
        %vm421 = vcmask 130048
        %v422 = vsel %vm421, %v420, 0.0
        %423 = vadd.xlane.f32.xlu0 %v422
        %v424 = vpop.xlane.xlu0 %423
        %v425 = vrcp.pop 16.0
        %v426 = vmul.f32 %v424, %v425
        %v427 = vmul.f32 %v171, %v426
        %vm428 = vcmask 113768
        %v429 = vsel %vm428, %v427, 0.0
        %v430 = vrot.slane %v429, 4
        %v431 = vadd.f32 %v429, %v430
        %v432 = vrot.slane %v431, 2
        %v433 = vadd.f32 %v431, %v432
        %v434 = vrot.slane %v433, 1
        %v435 = vadd.f32 %v433, %v434
        %436 = vrot.lane.b32.xlu0 %v171, 127
        %v437 = vpop.permute.xlu0 %436
        %v439 = vadd.f32 %v435, %v437
        %441 = vrot.lane.b32.xlu0 %v439, 115
        %v442 = vpop.permute.xlu0 %441
        %vm444 = vcmask 0
        %445 = vst.msk [vmem:[%s169] sm:$0x1] %vm444, %v442
        %p446 = scmp.lt.s32.totalorder %s17, 1
        %s447 = scalar_select %p446, %s17, 1
        %s448 = scalar_lea.vmem %s2, %s447
        // Predicated region
        $region37: #{debug_respr_mc_dropout_cnn.1} parent=27 // pred_check
          %p449 = pneg %p82
        $region38: #{debug_respr_mc_dropout_cnn.1} parent=27 // pred_check_branch
          %451 = sbr.rel (%p449) target = $region40
        $region39: #{debug_respr_mc_dropout_cnn.1} parent=27 // pred_region
          _
        $region40: #{debug_respr_mc_dropout_cnn.1} parent=27 // pred_fallthru
          _
      $region28: #{debug_respr_mc_dropout_cnn.1} parent=5 // pred_fallthru
        _
      %p452 = scmp.le.s32.totalorder 2, %s12
      // Predicated region
      $region41: #{debug_respr_mc_dropout_cnn.1} parent=5 // pred_check
        %p453 = pneg %p452
      $region42: #{debug_respr_mc_dropout_cnn.1} parent=5 // pred_check_branch
        %455 = sbr.rel (%p453) target = $region44
      $region43: #{debug_respr_mc_dropout_cnn.1} parent=5 // pred_region
        %s456 = ssub.s32 %s12, 2
        // Predicated region
        $region45: #{debug_respr_mc_dropout_cnn.1} parent=43 // pred_check
          %p457 = pneg %p88
        $region46: #{debug_respr_mc_dropout_cnn.1} parent=43 // pred_check_branch
          %459 = sbr.rel (%p457) target = $region48
        $region47: #{debug_respr_mc_dropout_cnn.1} parent=43 // pred_region
          %p460 = scmp.lt.s32.totalorder %s18, 1
          %s461 = scalar_select %p460, %s18, 1
          %s462 = scalar_lea.vmem %s2, %s461
        $region48: #{debug_respr_mc_dropout_cnn.1} parent=43 // pred_fallthru
          _
      $region44: #{debug_respr_mc_dropout_cnn.1} parent=5 // pred_fallthru
        _
    $region6: #{debug_respr_mc_dropout_cnn.1} parent=1 // loop_footer
      %s16 = sadd.s32 1, %s12
    $region7: #{debug_respr_mc_dropout_cnn.1} parent=1 // loop_footer_branch
      %11 = sbr.rel target = $region3
    $region8: #{debug_respr_mc_dropout_cnn.1} parent=1 // loop_exit
      _
    %463 = vsyncpa [#allocation3], 1
    %s464 = scalar_lea.sflag [#allocation3], 1
    %465 = vsyncpa %s464, 1
    %466 = vsyncpa [#allocation5], 1

</llo_original>
